<compile_context>
chip_gen: v7x
topology: tpu7x:2x2x1
jax: 0.10.0
libtpu: 0.0.40
codegen_flags: <defaults>
</compile_context>

<pallas_src>
import jax
import jax.numpy as jnp
from jax.experimental import pallas as pl
from jax.experimental.pallas import tpu as pltpu

BN_EPS = 1e-5


def _round_up(x, m):
    return (x + m - 1) // m * m


def _pick_tm(ohw_pad, k_pad, cout_p, tm_cap, vmem_budget=24 * 1024 * 1024):
    """Largest lane-dense tile width (multiple of 128) that divides ohw_pad, is <= tm_cap
    and keeps the (double-buffered) working set under a conservative VMEM budget."""
    q = ohw_pad // 128
    for d in sorted((d for d in range(1, q + 1) if q % d == 0), reverse=True):
        tm = 128 * d
        if tm > tm_cap:
            continue
        vmem = (2 * k_pad * tm * 2          # activation tile, bf16, double-buffered
                + 2 * cout_p * k_pad * 2    # resident weights (worst case 2 buffers)
                + 2 * cout_p * tm * 2       # pass-1 conv tile out, bf16
                + 2 * cout_p * tm * (2 + 4))  # pass-2 in (bf16) + out (f32)
        if vmem <= vmem_budget:
            return tm
    return 128


def conv_stats_kernel(x_ref, wT_ref, conv_ref, sum_ref, sumsq_ref):
    # x_ref:    (K_pad, TM) bf16   im2col tile of one sample, lane-dense along output pixels
    # wT_ref:   (Cout_p, K_pad) bf16  resident weights
    # conv_ref: (Cout_p, TM) bf16  conv output tile
    # sum/sumsq_ref: (1, 1, Cout_p, 1) f32 per-tile partial BN statistics
    conv = jnp.dot(wT_ref[...], x_ref[...], preferred_element_type=jnp.float32)
    conv_ref[...] = conv.astype(conv_ref.dtype)
    # One-pass BN statistics from the f32 accumulation (lane-axis reductions -> XLU).
    sum_ref[...] = jnp.sum(conv, axis=1, keepdims=True)[None, None]
    sumsq_ref[...] = jnp.sum(conv * conv, axis=1, keepdims=True)[None, None]


def bn_relu_kernel(conv_ref, scale_ref, shift_ref, o_ref):
    # Folded BN affine (per-channel scale/shift) + ReLU, computed in f32.
    conv = conv_ref[...].astype(jnp.float32)
    o_ref[...] = jnp.maximum(conv * scale_ref[...] + shift_ref[...], 0.0)


def cnn_block_forward(x, w, b, gamma, beta, *, stride, padding, tm_cap=1024):
    """x: (N, Cin, H, W) NCHW f32. w: (Cout, Cin, KH, KW). Returns NCHW f32."""
    del b  # Conv bias cancels exactly under train-mode BatchNorm centering (dead input).

    N, Cin, H, W = x.shape
    Cout, _, KH, KW = w.shape
    OH = (H + 2 * padding - KH) // stride + 1
    OW = (W + 2 * padding - KW) // stride + 1
    OHW = OH * OW
    M = N * OHW
    K = Cin * KH * KW

    K_pad = _round_up(K, 16)            # sublane-aligned for bf16 MXU feed
    Cout_p = _round_up(Cout, 8)
    OHW_pad = _round_up(OHW, 128)
    tm = _pick_tm(OHW_pad, K_pad, Cout_p, tm_cap)
    nt = OHW_pad // tm

    # --- glue: batch-major im2col in plain JAX, already in the kernel's layout ---
    xp = jnp.pad(x, ((0, 0), (0, 0), (padding, padding), (padding, padding)))
    xp = xp.astype(jnp.bfloat16)        # cast before the KHxKW expansion (halves its traffic)
    cols = []
    for i in range(KH):
        for j in range(KW):
            cols.append(xp[:, :, i:i + stride * OH:stride, j:j + stride * OW:stride])
    cols = jnp.stack(cols, axis=2)                       # (N, Cin, KH*KW, OH, OW)
    x3 = cols.reshape(N, K, OHW)                         # feature order matches w.reshape
    x3 = jnp.pad(x3, ((0, 0), (0, K_pad - K), (0, OHW_pad - OHW)))   # (N, K_pad, OHW_pad)

    wT = jnp.pad(w.reshape(Cout, K),
                 ((0, Cout_p - Cout), (0, K_pad - K))).astype(jnp.bfloat16)

    # ---- Pass 1: tiled MXU matmul + per-tile channel sum / sum-of-squares ----
    cost1 = pl.CostEstimate(
        flops=2 * N * OHW_pad * K_pad * Cout_p,
        transcendentals=0,
        bytes_accessed=(x3.size * 2 + wT.size * 2
                        + N * Cout_p * OHW_pad * 2 + 2 * N * nt * Cout_p * 4),
    )
    conv3, part_sum, part_sumsq = pl.pallas_call(
        conv_stats_kernel,
        out_shape=(
            jax.ShapeDtypeStruct((N, Cout_p, OHW_pad), jnp.bfloat16),
            jax.ShapeDtypeStruct((N, nt, Cout_p, 1), jnp.float32),
            jax.ShapeDtypeStruct((N, nt, Cout_p, 1), jnp.float32),
        ),
        grid_spec=pltpu.PrefetchScalarGridSpec(
            num_scalar_prefetch=0,
            grid=(N, nt),
            in_specs=[
                pl.BlockSpec((None, K_pad, tm), lambda n, m: (n, 0, m)),   # activations
                pl.BlockSpec((Cout_p, K_pad), lambda n, m: (0, 0)),        # weights (resident)
            ],
            out_specs=[
                pl.BlockSpec((None, Cout_p, tm), lambda n, m: (n, 0, m)),  # conv, lane-dense
                pl.BlockSpec((1, 1, Cout_p, 1), lambda n, m: (n, m, 0, 0)),  # channel sum
                pl.BlockSpec((1, 1, Cout_p, 1), lambda n, m: (n, m, 0, 0)),  # channel sumsq
            ],
        ),
        compiler_params=pltpu.CompilerParams(
            dimension_semantics=("parallel", "parallel"),
            vmem_limit_bytes=32 * 1024 * 1024,
        ),
        cost_estimate=cost1,
    )(x3, wT)

    # ---- BatchNorm2d training-mode stats + folded affine (tiny, plain JAX) ----
    total_sum = jnp.sum(part_sum[..., 0], axis=(0, 1))        # (Cout_p,)
    total_sumsq = jnp.sum(part_sumsq[..., 0], axis=(0, 1))
    mean = total_sum / M                                      # padded cols/rows add exact 0
    var = jnp.maximum(total_sumsq / M - mean * mean, 0.0)     # biased batch variance
    inv_std = jax.lax.rsqrt(var + BN_EPS)
    gamma_p = jnp.pad(gamma.astype(jnp.float32), (0, Cout_p - Cout))
    beta_p = jnp.pad(beta.astype(jnp.float32), (0, Cout_p - Cout))
    scale = (gamma_p * inv_std).reshape(Cout_p, 1)
    shift = (beta_p - mean * gamma_p * inv_std).reshape(Cout_p, 1)

    # ---- Pass 2: tiled normalize (single FMA) + ReLU ----
    cost2 = pl.CostEstimate(
        flops=3 * N * Cout_p * OHW_pad,
        transcendentals=0,
        bytes_accessed=N * Cout_p * OHW_pad * (2 + 4) + 2 * Cout_p * 4,
    )
    y3 = pl.pallas_call(
        bn_relu_kernel,
        out_shape=jax.ShapeDtypeStruct((N, Cout_p, OHW_pad), jnp.float32),
        grid_spec=pltpu.PrefetchScalarGridSpec(
            num_scalar_prefetch=0,
            grid=(N, nt),
            in_specs=[
                pl.BlockSpec((None, Cout_p, tm), lambda n, m: (n, 0, m)),
                pl.BlockSpec((Cout_p, 1), lambda n, m: (0, 0)),
                pl.BlockSpec((Cout_p, 1), lambda n, m: (0, 0)),
            ],
            out_specs=pl.BlockSpec((None, Cout_p, tm), lambda n, m: (n, 0, m)),
        ),
        compiler_params=pltpu.CompilerParams(
            dimension_semantics=("parallel", "parallel"),
            vmem_limit_bytes=32 * 1024 * 1024,
        ),
        cost_estimate=cost2,
    )(conv3, scale, shift)

    # Already batch-major: just drop padding and reshape (no transpose needed).
    return y3[:, :Cout, :OHW].reshape(N, Cout, OH, OW)


def _reference(x, w, b, gamma, beta, *, stride, padding):
    """Pure-JAX reference of the same forward for a sanity check."""
    conv = jax.lax.conv_general_dilated(
        x, w, window_strides=(stride, stride),
        padding=[(padding, padding), (padding, padding)],
        dimension_numbers=("NCHW", "OIHW", "NCHW"),
    ) + b.reshape(1, -1, 1, 1)
    mean = jnp.mean(conv, axis=(0, 2, 3), keepdims=True)
    var = jnp.mean((conv - mean) ** 2, axis=(0, 2, 3), keepdims=True)
    y = (conv - mean) * jax.lax.rsqrt(var + BN_EPS)
    y = y * gamma.reshape(1, -1, 1, 1) + beta.reshape(1, -1, 1, 1)
    return jnp.maximum(y, 0.0)


if __name__ == "__main__":
    # CnnBlock(in_channels=4, out_channels=8, kernel_size=3, padding=1, stride=1)
    N, Cin, H, W = 2, 4, 16, 16
    Cout, KH, KW = 8, 3, 3
    stride, padding = 1, 1

    key = jax.random.PRNGKey(0)
    kx, kw, kb = jax.random.split(key, 3)
    x = jax.random.normal(kx, (N, Cin, H, W), dtype=jnp.float32)
    w = 0.1 * jax.random.normal(kw, (Cout, Cin, KH, KW), dtype=jnp.float32)
    b = 0.1 * jax.random.normal(kb, (Cout,), dtype=jnp.float32)
    gamma = jnp.ones((Cout,), dtype=jnp.float32)   # nn.BatchNorm2d default weight
    beta = jnp.zeros((Cout,), dtype=jnp.float32)   # nn.BatchNorm2d default bias

    # Small tile cap at this toy size so the pipelined multi-step grid (2x2) is exercised;
    # real shapes use the default tm_cap=1024.
    out = cnn_block_forward(x, w, b, gamma, beta, stride=stride, padding=padding, tm_cap=128)
    out = jax.block_until_ready(out)

    ref = _reference(x, w, b, gamma, beta, stride=stride, padding=padding)
    assert out.shape == (N, Cout, H, W)
    assert jnp.allclose(out, ref, atol=3e-2, rtol=3e-2), "mismatch vs JAX reference"

    print("KERNEL_OK")
</pallas_src>

<mosaic_0001>
module attributes {stable_mosaic.version = 11 : i64} {
  func.func @conv_stats_kernel(%arg0: i32, %arg1: i32, %arg2: memref<1x48x128xbf16, #tpu.memory_space<vmem>>, %arg3: memref<8x48xbf16, #tpu.memory_space<vmem>>, %arg4: memref<1x8x128xbf16, #tpu.memory_space<vmem>>, %arg5: memref<1x1x8x1xf32, #tpu.memory_space<vmem>>, %arg6: memref<1x1x8x1xf32, #tpu.memory_space<vmem>>) attributes {dimension_semantics = [#tpu.dimension_semantics<parallel>, #tpu.dimension_semantics<parallel>], iteration_bounds = array<i64: 2, 2>, scalar_prefetch = 0 : i64, scratch_operands = 0 : i64, tpu.core_type = #tpu.core_type<tc>, window_params = [{transform_indices = @transform_0, window_bounds = array<i64: 1, 48, 128>}, {pipeline_mode = #tpu.pipeline_mode<synchronous>, transform_indices = @transform_1, window_bounds = array<i64: 8, 48>}, {transform_indices = @transform_2, window_bounds = array<i64: 1, 8, 128>}, {transform_indices = @transform_3, window_bounds = array<i64: 1, 1, 8, 1>}, {transform_indices = @transform_4, window_bounds = array<i64: 1, 1, 8, 1>}]} {
    %c0 = arith.constant 0 : index
    %c0_0 = arith.constant 0 : index
    %0 = vector.load %arg3[%c0, %c0_0] : memref<8x48xbf16, #tpu.memory_space<vmem>>, vector<8x48xbf16>
    %c0_1 = arith.constant 0 : index
    %c0_2 = arith.constant 0 : index
    %c0_3 = arith.constant 0 : index
    %1 = vector.load %arg2[%c0_1, %c0_2, %c0_3] : memref<1x48x128xbf16, #tpu.memory_space<vmem>>, vector<1x48x128xbf16>
    %2 = vector.shape_cast %1 : vector<1x48x128xbf16> to vector<48x128xbf16>
    %cst = arith.constant dense<0.000000e+00> : vector<8x128xf32>
    %3 = tpu.matmul %0, %2, %cst {dimension_numbers = #tpu.dot_dimension_numbers<[1], [0], [0], [1], [0, 0, 1, 1], [], []>} : vector<8x48xbf16>, vector<48x128xbf16>, vector<8x128xf32> -> vector<8x128xf32>
    %4 = arith.truncf %3 : vector<8x128xf32> to vector<8x128xbf16>
    %c0_4 = arith.constant 0 : index
    %c0_5 = arith.constant 0 : index
    %c0_6 = arith.constant 0 : index
    %5 = vector.load %arg4[%c0_4, %c0_5, %c0_6] : memref<1x8x128xbf16, #tpu.memory_space<vmem>>, vector<1x8x128xbf16>
    %6 = vector.shape_cast %5 : vector<1x8x128xbf16> to vector<8x128xbf16>
    %7 = vector.shape_cast %4 : vector<8x128xbf16> to vector<1x8x128xbf16>
    tpu.vector_store %arg4[%c0_4, %c0_5, %c0_6], %7 {strides = array<i32>} : memref<1x8x128xbf16, #tpu.memory_space<vmem>>, vector<1x8x128xbf16>,
    %cst_7 = arith.constant dense<0.000000e+00> : vector<8xf32>
    %8 = vector.multi_reduction <add>, %3, %cst_7 [1] : vector<8x128xf32> to vector<8xf32>
    %9 = vector.shape_cast %8 : vector<8xf32> to vector<8x1xf32>
    %10 = vector.shape_cast %9 : vector<8x1xf32> to vector<1x1x8x1xf32>
    %c0_8 = arith.constant 0 : index
    %c0_9 = arith.constant 0 : index
    %c0_10 = arith.constant 0 : index
    %c0_11 = arith.constant 0 : index
    %11 = vector.load %arg5[%c0_8, %c0_9, %c0_10, %c0_11] : memref<1x1x8x1xf32, #tpu.memory_space<vmem>>, vector<1x1x8x1xf32>
    tpu.vector_store %arg5[%c0_8, %c0_9, %c0_10, %c0_11], %10 {strides = array<i32>} : memref<1x1x8x1xf32, #tpu.memory_space<vmem>>, vector<1x1x8x1xf32>,
    %12 = arith.mulf %3, %3 : vector<8x128xf32>
    %cst_12 = arith.constant dense<0.000000e+00> : vector<8xf32>
    %13 = vector.multi_reduction <add>, %12, %cst_12 [1] : vector<8x128xf32> to vector<8xf32>
    %14 = vector.shape_cast %13 : vector<8xf32> to vector<8x1xf32>
    %15 = vector.shape_cast %14 : vector<8x1xf32> to vector<1x1x8x1xf32>
    %c0_13 = arith.constant 0 : index
    %c0_14 = arith.constant 0 : index
    %c0_15 = arith.constant 0 : index
    %c0_16 = arith.constant 0 : index
    %16 = vector.load %arg6[%c0_13, %c0_14, %c0_15, %c0_16] : memref<1x1x8x1xf32, #tpu.memory_space<vmem>>, vector<1x1x8x1xf32>
    tpu.vector_store %arg6[%c0_13, %c0_14, %c0_15, %c0_16], %15 {strides = array<i32>} : memref<1x1x8x1xf32, #tpu.memory_space<vmem>>, vector<1x1x8x1xf32>,
    return
  }
  func.func @transform_0(%arg0: i32, %arg1: i32) -> (i32, i32, i32) {
    %c0_i32 = arith.constant 0 : i32
    %c0_i32_0 = arith.constant 0 : i32
    return %arg0, %c0_i32, %arg1 : i32, i32, i32
  }
  func.func @transform_1(%arg0: i32, %arg1: i32) -> (i32, i32) {
    %c0_i32 = arith.constant 0 : i32
    %c0_i32_0 = arith.constant 0 : i32
    %c0_i32_1 = arith.constant 0 : i32
    return %c0_i32, %c0_i32_0 : i32, i32
  }
  func.func @transform_2(%arg0: i32, %arg1: i32) -> (i32, i32, i32) {
    %c0_i32 = arith.constant 0 : i32
    %c0_i32_0 = arith.constant 0 : i32
    return %arg0, %c0_i32, %arg1 : i32, i32, i32
  }
  func.func @transform_3(%arg0: i32, %arg1: i32) -> (i32, i32, i32, i32) {
    %c0_i32 = arith.constant 0 : i32
    %c0_i32_0 = arith.constant 0 : i32
    %c0_i32_1 = arith.constant 0 : i32
    return %arg0, %arg1, %c0_i32, %c0_i32_0 : i32, i32, i32, i32
  }
  func.func @transform_4(%arg0: i32, %arg1: i32) -> (i32, i32, i32, i32) {
    %c0_i32 = arith.constant 0 : i32
    %c0_i32_0 = arith.constant 0 : i32
    %c0_i32_1 = arith.constant 0 : i32
    return %arg0, %arg1, %c0_i32, %c0_i32_0 : i32, i32, i32, i32
  }
}

</mosaic_0001>

<llo_original>
// kernel: tpu_custom_call.1
$region0: #{tpu_custom_call.1}
  #allocation0 [shape = 'u32[]', space=smem, size = 0x4, offset = 0x4, fixed_abs, tag = 'smem constant byte address 0x4 - core index']
  #allocation1 [shape = 'u32[144,128]{1,0:T(1,128)}', space=vmem, size = 0x12000, scoped, tag = 'internal scratch']
  %s0 = inlined_call_operand.hbm [shape: bf16[2,48,256], index: 0, kind: input, shape index: {}]
  %s1 = inlined_call_operand.hbm [shape: bf16[8,48], index: 1, kind: input, shape index: {}]
  %s2 = inlined_call_operand.hbm [shape: bf16[2,8,256], index: 2, kind: output, shape index: {0}]
  %s3 = inlined_call_operand.vmem [shape: f32[2,2,8,1], index: 3, kind: output, shape index: {1}]
  %s4 = inlined_call_operand.vmem [shape: f32[2,2,8,1], index: 4, kind: output, shape index: {2}]
  %5 = xla_tuple %s2, %s3, %s4
  %s6 = sld [smem:[#allocation0]]
  $region65: #{tpu_custom_call.1} parent=0
    _
  %s8 = ssub.s32 1, %s6
  %s9 = scalar_select 0, %s8, %s6
  $region1: #{tpu_custom_call.1} parent=0
    #allocation2 [shape = 'u8[24576]{0}', space=vmem, size = 0x6000, scoped, tag = 'input window, operand 0']
    #allocation3 [shape = 's32[2]{0}', space=sflag, size = 0x8, scoped, tag = 'scoped memory for tpu_custom_call.1']
    #allocation4 [shape = 's32[2]{0}', space=sflag, size = 0x8, scoped, tag = 'scoped memory for tpu_custom_call.1']
    #allocation5 [shape = 'u8[2048]{0}', space=vmem, size = 0x800, scoped, tag = 'input window, operand 1, single buffered']
    #allocation6 [shape = 's32[1]{0}', space=sflag, size = 0x4, scoped, tag = 'scoped memory for tpu_custom_call.1']
    #allocation7 [shape = 'u8[4096]{0}', space=vmem, size = 0x1000, scoped, tag = 'output window, operand 0']
    %10 = vsyncpa [#allocation3], 0
    %s11 = scalar_lea.sflag [#allocation3], 1
    %12 = vsyncpa %s11, 0
    %13 = vsyncpa [#allocation6], 0
    %14 = vsyncpa [#allocation4], 0
    %s15 = scalar_lea.sflag [#allocation4], 1
    %16 = vsyncpa %s15, 0
    loop: start=0, step=1, limit=6
    $region2: #{tpu_custom_call.1} parent=1 // loop_pre_header
      _
    $region3: #{tpu_custom_call.1} parent=1 // loop_header
      %s18 = sphi 0, %s22
      %p19 = scmp.ge.s32.totalorder %s18, 6
      %s25 = sphi 0, %s37
      %s26 = sphi 0, %s33
      %s27 = sphi 0, %s25
      %s28 = sphi 0, %s26
      %s29 = sphi 0, %s27
      %s30 = sphi 0, %s28
      %s42 = sphi 0, %s44
      %s45 = sphi 0, %s42
      %s46 = sphi 0, %s45
      %s62 = sphi 0, %s46
      %s66 = sphi 0, %s66
      %s68 = sphi 0, %s66
      %s69 = sphi 0, %s68
      %s83 = sphi 0, %s69
      %s91 = sphi 0, %s93
      %s94 = sphi 0, %s91
      %s95 = sphi 0, %s94
      %s111 = sphi 0, %s95
      %s119 = sphi 0, %s121
      %s122 = sphi 0, %s119
      %s123 = sphi 0, %s122
      %s139 = sphi 0, %s123
      %s147 = sphi 0, %s149
      %s150 = sphi 0, %s147
      %s151 = sphi 0, %s150
      %s167 = sphi 0, %s151
    $region4: #{tpu_custom_call.1} parent=1 // loop_header_branch
      %21 = sbr.rel (%p19) target = $region8
    $region5: #{tpu_custom_call.1} parent=1 // loop_body
      %s23 = ssub.s32 %s18, 1
      %s24 = ssub.s32 %s18, 2
      %s31 = sadd.s32 1, %s26
      %p32 = scmp.ge.s32.totalorder %s31, 2
      %s33 = scalar_select %p32, 0, %s31
      %s34 = sadd.s32 1, %s25
      %s35 = scalar_select %p32, %s34, %s25
      %p36 = scmp.ge.s32.totalorder %s35, 2
      %s37 = scalar_select %p36, 0, %s35
      %s38 = ssub.s32 %s25, %s37
      %s39 = ssub.s32 %s26, %s33
      %s40 = sor.u32 %s38, %s39
      %p41 = scmp.eq.s32.totalorder %s40, 0
      %s43 = sadd.s32 %s42, 1
      %s44 = scalar_select %p41, %s42, %s43
      %p47 = pneg %p41
      %p48 = scmp.eq.s32.totalorder %s18, 3
      %p49 = por %p47, %p48
      %p50 = scmp.ne.s32.totalorder %s42, %s45
      %p51 = scmp.eq.s32.totalorder %s18, 0
      %p52 = por %p50, %p51
      %p53 = scmp.ne.s32.totalorder %s42, %s45
      %p54 = scmp.eq.s32.totalorder %s23, 3
      %p55 = por %p53, %p54
      %p56 = scmp.ne.s32.totalorder %s45, %s46
      %p57 = scmp.eq.s32.totalorder %s23, 0
      %p58 = por %p56, %p57
      %p59 = scmp.ne.s32.totalorder %s45, %s46
      %p60 = scmp.eq.s32.totalorder %s24, 3
      %p61 = por %p59, %p60
      %p63 = scmp.ne.s32.totalorder %s46, %s62
      %p64 = scmp.eq.s32.totalorder %s24, 0
      %p65 = por %p63, %p64
      %s67 = sadd.s32 %s66, 1
      %p70 = scmp.eq.s32.totalorder %s18, 3
      %p71 = scmp.ne.s32.totalorder %s66, %s68
      %p72 = scmp.eq.s32.totalorder %s18, 0
      %p73 = por %p71, %p72
      %p74 = scmp.ne.s32.totalorder %s66, %s68
      %p75 = scmp.eq.s32.totalorder %s23, 3
      %p76 = por %p74, %p75
      %p77 = scmp.ne.s32.totalorder %s68, %s69
      %p78 = scmp.eq.s32.totalorder %s23, 0
      %p79 = por %p77, %p78
      %p80 = scmp.ne.s32.totalorder %s68, %s69
      %p81 = scmp.eq.s32.totalorder %s24, 3
      %p82 = por %p80, %p81
      %p84 = scmp.ne.s32.totalorder %s69, %s83
      %p85 = scmp.eq.s32.totalorder %s24, 0
      %p86 = por %p84, %p85
      %s87 = ssub.s32 %s25, %s37
      %s88 = ssub.s32 %s26, %s33
      %s89 = sor.u32 %s87, %s88
      %p90 = scmp.eq.s32.totalorder %s89, 0
      %s92 = sadd.s32 %s91, 1
      %s93 = scalar_select %p90, %s91, %s92
      %p96 = pneg %p90
      %p97 = scmp.eq.s32.totalorder %s18, 3
      %p98 = por %p96, %p97
      %p99 = scmp.ne.s32.totalorder %s91, %s94
      %p100 = scmp.eq.s32.totalorder %s18, 0
      %p101 = por %p99, %p100
      %p102 = scmp.ne.s32.totalorder %s91, %s94
      %p103 = scmp.eq.s32.totalorder %s23, 3
      %p104 = por %p102, %p103
      %p105 = scmp.ne.s32.totalorder %s94, %s95
      %p106 = scmp.eq.s32.totalorder %s23, 0
      %p107 = por %p105, %p106
      %p108 = scmp.ne.s32.totalorder %s94, %s95
      %p109 = scmp.eq.s32.totalorder %s24, 3
      %p110 = por %p108, %p109
      %p112 = scmp.ne.s32.totalorder %s95, %s111
      %p113 = scmp.eq.s32.totalorder %s24, 0
      %p114 = por %p112, %p113
      %s115 = ssub.s32 %s25, %s37
      %s116 = ssub.s32 %s26, %s33
      %s117 = sor.u32 %s115, %s116
      %p118 = scmp.eq.s32.totalorder %s117, 0
      %s120 = sadd.s32 %s119, 1
      %s121 = scalar_select %p118, %s119, %s120
      %p124 = pneg %p118
      %p125 = scmp.eq.s32.totalorder %s18, 3
      %p126 = por %p124, %p125
      %p127 = scmp.ne.s32.totalorder %s119, %s122
      %p128 = scmp.eq.s32.totalorder %s18, 0
      %p129 = por %p127, %p128
      %p130 = scmp.ne.s32.totalorder %s119, %s122
      %p131 = scmp.eq.s32.totalorder %s23, 3
      %p132 = por %p130, %p131
      %p133 = scmp.ne.s32.totalorder %s122, %s123
      %p134 = scmp.eq.s32.totalorder %s23, 0
      %p135 = por %p133, %p134
      %p136 = scmp.ne.s32.totalorder %s122, %s123
      %p137 = scmp.eq.s32.totalorder %s24, 3
      %p138 = por %p136, %p137
      %p140 = scmp.ne.s32.totalorder %s123, %s139
      %p141 = scmp.eq.s32.totalorder %s24, 0
      %p142 = por %p140, %p141
      %s143 = ssub.s32 %s25, %s37
      %s144 = ssub.s32 %s26, %s33
      %s145 = sor.u32 %s143, %s144
      %p146 = scmp.eq.s32.totalorder %s145, 0
      %s148 = sadd.s32 %s147, 1
      %s149 = scalar_select %p146, %s147, %s148
      %p152 = pneg %p146
      %p153 = scmp.eq.s32.totalorder %s18, 3
      %p154 = por %p152, %p153
      %p155 = scmp.ne.s32.totalorder %s147, %s150
      %p156 = scmp.eq.s32.totalorder %s18, 0
      %p157 = por %p155, %p156
      %p158 = scmp.ne.s32.totalorder %s147, %s150
      %p159 = scmp.eq.s32.totalorder %s23, 3
      %p160 = por %p158, %p159
      %p161 = scmp.ne.s32.totalorder %s150, %s151
      %p162 = scmp.eq.s32.totalorder %s23, 0
      %p163 = por %p161, %p162
      %p164 = scmp.ne.s32.totalorder %s150, %s151
      %p165 = scmp.eq.s32.totalorder %s24, 3
      %p166 = por %p164, %p165
      %p168 = scmp.ne.s32.totalorder %s151, %s167
      %p169 = scmp.eq.s32.totalorder %s24, 0
      %p170 = por %p168, %p169
      %p171 = scmp.le.s32.totalorder 1, %s18
      %p172 = scmp.lt.s32.totalorder %s18, 5
      %p173 = pnand %p171, %p172
      %p174 = pneg %p173
      // Predicated region
      $region9: #{tpu_custom_call.1} parent=5 // pred_check
        _
      $region10: #{tpu_custom_call.1} parent=5 // pred_check_branch
        %176 = sbr.rel (%p173) target = $region12
      $region11: #{tpu_custom_call.1} parent=5 // pred_region
        %s177 = ssub.s32 %s18, 1
        // Predicated region
        $region13: #{tpu_custom_call.1} parent=11 // pred_check
          %p178 = pneg %p79
        $region14: #{tpu_custom_call.1} parent=11 // pred_check_branch
          %180 = sbr.rel (%p178) target = $region16
        $region15: #{tpu_custom_call.1} parent=11 // pred_region
          %s182 = ssub.s32 64, 64
          %183 = vsyncadd [#allocation6], %s182
          %s185 = sshll.u32 [#allocation5], 4
          %s186 = int_to_ptr.vmem [resolvable:$true] %s185
          %188 = dma.hbm_to_vmem [thread:$0]  %s1, 64, %s186, [#allocation6]
        $region16: #{tpu_custom_call.1} parent=11 // pred_fallthru
          _
      $region12: #{tpu_custom_call.1} parent=5 // pred_fallthru
        _
      %p189 = scmp.lt.s32.totalorder %s18, 4
      // Predicated region
      $region17: #{tpu_custom_call.1} parent=5 // pred_check
        %p190 = pneg %p189
      $region18: #{tpu_custom_call.1} parent=5 // pred_check_branch
        %192 = sbr.rel (%p190) target = $region20
      $region19: #{tpu_custom_call.1} parent=5 // pred_region
        // Predicated region
        $region21: #{tpu_custom_call.1} parent=19 // pred_check
          %p193 = pneg %p52
        $region22: #{tpu_custom_call.1} parent=19 // pred_check_branch
          %195 = sbr.rel (%p193) target = $region24
        $region23: #{tpu_custom_call.1} parent=19 // pred_region
          %s196 = sand.u32 %s42, 1
          %s197 = scalar_lea.sflag [#allocation3], %s196
          %s198 = sand.u32 %s42, 1
          %s199 = smul.addr %s198, 24
          %s200 = scalar_lea.vmem [#allocation2], %s199
          %s202 = ssub.s32 384, 384
          %203 = vsyncadd %s197, %s202
          %s204 = smul.addr %s25, 12
          %s205 = sadd.s32 %s26, %s204
          %s206 = smul.addr %s205, 64
          %s207 = scalar_lea.hbm %s0, %s206
          %s208 = sshll.u32 %s200, 4
          %s209 = int_to_ptr.vmem [resolvable:$true] %s208
          %214 = dma.hbm_to_vmem [thread:$0]  %s207, 384, %s209, %s197, 128, 64, 4
        $region24: #{tpu_custom_call.1} parent=19 // pred_fallthru
          _
      $region20: #{tpu_custom_call.1} parent=5 // pred_fallthru
        _
      %p215 = scmp.le.s32.totalorder 1, %s18
      %p216 = scmp.lt.s32.totalorder %s18, 5
      %p217 = pnand %p215, %p216
      %p218 = pneg %p217
      // Predicated region
      $region25: #{tpu_custom_call.1} parent=5 // pred_check
        _
      $region26: #{tpu_custom_call.1} parent=5 // pred_check_branch
        %220 = sbr.rel (%p217) target = $region28
      $region27: #{tpu_custom_call.1} parent=5 // pred_region
        %s221 = ssub.s32 %s18, 1
        %s222 = sand.u32 %s45, 1
        %s223 = scalar_lea.sflag [#allocation3], %s222
        %s224 = sand.u32 %s45, 1
        %s225 = smul.addr %s224, 24
        %s226 = scalar_lea.vmem [#allocation2], %s225
        // Predicated region
        $region29: #{tpu_custom_call.1} parent=27 // pred_check
          %p227 = pneg %p58
        $region30: #{tpu_custom_call.1} parent=27 // pred_check_branch
          %229 = sbr.rel (%p227) target = $region32
        $region31: #{tpu_custom_call.1} parent=27 // pred_region
          %230 = dma.done %s223, 384
        $region32: #{tpu_custom_call.1} parent=27 // pred_fallthru
          _
        // Predicated region
        $region33: #{tpu_custom_call.1} parent=27 // pred_check
          %p231 = pneg %p79
        $region34: #{tpu_custom_call.1} parent=27 // pred_check_branch
          %233 = sbr.rel (%p231) target = $region36
        $region35: #{tpu_custom_call.1} parent=27 // pred_region
          %234 = dma.done [#allocation6], 64
        $region36: #{tpu_custom_call.1} parent=27 // pred_fallthru
          _
        %s235 = sand.u32 %s45, 1
        %s236 = scalar_lea.sflag [#allocation3], %s235
        %s237 = sand.u32 %s45, 1
        %s238 = smul.addr %s237, 24
        %s239 = scalar_lea.vmem [#allocation2], %s238
        %p240 = pneg %p58
        %p241 = pneg %p55
        %p242 = pneg %p79
        %p243 = pneg %p76
        %p244 = pneg %p107
        %p245 = pneg %p104
        %s246 = sand.u32 %s94, 1
        %s247 = scalar_lea.sflag [#allocation4], %s246
        %s248 = sand.u32 %s94, 1
        %s249 = smul.addr %s248, 4
        %s250 = scalar_lea.vmem [#allocation7], %s249
        %p251 = pneg %p135
        %p252 = pneg %p132
        %p253 = scmp.lt.s32.totalorder %s27, 1
        %s254 = scalar_select %p253, %s27, 1
        %p255 = scmp.lt.s32.totalorder %s28, 1
        %s256 = scalar_select %p255, %s28, 1
        %s257 = smul.addr %s254, 2
        %s258 = sadd.s32 %s256, %s257
        %s259 = smul.addr %s258, 8
        %s260 = scalar_lea.vmem %s3, %s259
        %p261 = pneg %p163
        %p262 = pneg %p160
        %p263 = scmp.lt.s32.totalorder %s27, 1
        %s264 = scalar_select %p263, %s27, 1
        %p265 = scmp.lt.s32.totalorder %s28, 1
        %s266 = scalar_select %p265, %s28, 1
        %s267 = smul.addr %s264, 2
        %s268 = sadd.s32 %s266, %s267
        %s269 = smul.addr %s268, 8
        %s270 = scalar_lea.vmem %s4, %s269
        %p271 = scmp.lt.s32.totalorder %s27, 1
        %s272 = scalar_select %p271, %s27, 1
        %p273 = scmp.lt.s32.totalorder %s28, 1
        %s274 = scalar_select %p273, %s28, 1
        %s275 = smul.addr %s272, 2
        %s276 = sadd.s32 %s274, %s275
        %s277 = smul.addr %s276, 8
        %s278 = scalar_lea.vmem %s3, %s277
        %p279 = scmp.lt.s32.totalorder %s27, 1
        %s280 = scalar_select %p279, %s27, 1
        %p281 = scmp.lt.s32.totalorder %s28, 1
        %s282 = scalar_select %p281, %s28, 1
        %s283 = smul.addr %s280, 2
        %s284 = sadd.s32 %s282, %s283
        %s285 = smul.addr %s284, 8
        %s286 = scalar_lea.vmem %s4, %s285
        %v288 = vld [vmem:[#allocation5] sm:$0xf]
        %v289 = vld [vmem:[%s226] sm:$0xf]
        %v290 = vld [vmem:[%s226 + $0x4] sm:$0xf]
        %v291 = vld [vmem:[%s226 + $0x8] sm:$0xf]
        %v292 = vld [vmem:[%s226 + $0xc] sm:$0xf]
        %v293 = vld [vmem:[%s226 + $0x10] sm:$0xf]
        %v294 = vld [vmem:[%s226 + $0x14] sm:$0xf]
        %v301 = vunpack.c.l.b16 %v289
        %v302 = vunpack.c.l.b16 %v290
        %v303 = vunpack.c.l.b16 %v291
        %v304 = vunpack.c.l.b16 %v292
        %v305 = vunpack.c.l.b16 %v293
        %v306 = vunpack.c.l.b16 %v294
        %v307 = vpack.c.b16 %v302, %v301
        %v308 = vpack.c.b16 %v304, %v303
        %v309 = vpack.c.b16 %v306, %v305
        %vm313 = vcmask 392192
        %v315 = vsel %vm313, %v288, 0
        %317 = vmatprep.subr.bf16.mxu0 0
        %318 = vmatpush1.bf16.msra.mxu0 %v307
        %319 = vmatprep.subr.bf16.mxu0 0
        %320 = vmatpush1.bf16.msra.mxu0 %v308
        %321 = vmatprep.subr.bf16.mxu0 0
        %322 = vmatpush1.bf16.msra.mxu0 %v309
        %323 = vmatprep.subr.bf16.mxu0 0
        %324 = vmatpush1.bf16.msra.mxu0 0
        %325 = vmatprep.subr.bf16.mxu0 0
        %326 = vmatpush1.bf16.msra.mxu0 0
        %327 = vmatprep.subr.bf16.mxu0 0
        %328 = vmatpush1.bf16.msra.mxu0 0
        %329 = vmatprep.subr.bf16.mxu0 0
        %330 = vmatpush1.bf16.msra.mxu0 0
        %331 = vmatprep.subr.bf16.mxu0 0
        %332 = vmatpush1.bf16.msra.mxu0 0
        %333 = vmatprep.subr.bf16.mxu0 0
        %334 = vmatpush1.bf16.msra.mxu0 0
        %335 = vmatprep.subr.bf16.mxu0 0
        %336 = vmatpush1.bf16.msra.mxu0 0
        %337 = vmatprep.subr.bf16.mxu0 0
        %338 = vmatpush1.bf16.msra.mxu0 0
        %339 = vmatprep.subr.bf16.mxu0 0
        %340 = vmatpush1.bf16.msra.mxu0 0
        %341 = vmatprep.subr.bf16.mxu0 0
        %342 = vmatpush1.bf16.msra.mxu0 0
        %343 = vmatprep.subr.bf16.mxu0 0
        %344 = vmatpush1.bf16.msra.mxu0 0
        %345 = vmatprep.subr.bf16.mxu0 0
        %346 = vmatpush1.bf16.msra.mxu0 0
        %347 = vmatprep.subr.bf16.mxu0 0
        %348 = vmatpush1.bf16.msra.mxu0 0
        %349 = vmatprep.mubr.bf16.mxu0 0
        %350 = vmatmul.mubr.bf16.gmra.mrb[0].mxu0 %v315
        %v351 = vpop.f32.mrb[0].mxu0
        %v352 = vadd.f32 0.0, %v351
        %v353 = vpop.f32.mrb[0].mxu0
        %v354 = vpop.f32.mrb[0].mxu0
        %v355 = vpop.f32.mrb[0].mxu0
        %356 = vdwg.mxu0
        %v357 = vpack.c.bf16 %v352, %v352
        %358 = vst [vmem:[%s250] sm:$0xf] %v357
        %359 = vadd.xlane.f32.xlu0 %v352
        %v360 = vpop.xlane.xlu0 %359
        %vm361 = vcmask 7168
        %362 = vst.msk [vmem:[%s278] sm:$0xff] %vm361, %v360
        %v363 = vmul.f32 %v352, %v352
        %364 = vadd.xlane.f32.xlu0 %v363
        %v365 = vpop.xlane.xlu0 %364
        %366 = vst.msk [vmem:[%s286] sm:$0xff] %vm361, %v365
        %s367 = sand.u32 %s94, 1
        %s368 = scalar_lea.sflag [#allocation4], %s367
        %s369 = sand.u32 %s94, 1
        %s370 = smul.addr %s369, 4
        %s371 = scalar_lea.vmem [#allocation7], %s370
        %p372 = scmp.lt.s32.totalorder %s27, 1
        %s373 = scalar_select %p372, %s27, 1
        %p374 = scmp.lt.s32.totalorder %s28, 1
        %s375 = scalar_select %p374, %s28, 1
        %s376 = smul.addr %s373, 2
        %s377 = sadd.s32 %s375, %s376
        %s378 = smul.addr %s377, 8
        %s379 = scalar_lea.vmem %s3, %s378
        %p380 = scmp.lt.s32.totalorder %s27, 1
        %s381 = scalar_select %p380, %s27, 1
        %p382 = scmp.lt.s32.totalorder %s28, 1
        %s383 = scalar_select %p382, %s28, 1
        %s384 = smul.addr %s381, 2
        %s385 = sadd.s32 %s383, %s384
        %s386 = smul.addr %s385, 8
        %s387 = scalar_lea.vmem %s4, %s386
        // Predicated region
        $region37: #{tpu_custom_call.1} parent=27 // pred_check
          %p388 = pneg %p104
        $region38: #{tpu_custom_call.1} parent=27 // pred_check_branch
          %390 = sbr.rel (%p388) target = $region40
        $region39: #{tpu_custom_call.1} parent=27 // pred_region
          %s392 = ssub.s32 64, 64
          %393 = vsyncadd %s368, %s392
          %s394 = smul.addr %s27, 2
          %s395 = sadd.s32 %s28, %s394
          %s396 = smul.addr %s395, 64
          %s397 = scalar_lea.hbm %s2, %s396
          %s399 = sshll.u32 %s371, 4
          %s400 = int_to_ptr.vmem [resolvable:$true] %s399
          %402 = dma.vmem_to_hbm [thread:$0]  %s400, 64, %s397, %s368
        $region40: #{tpu_custom_call.1} parent=27 // pred_fallthru
          _
        // Predicated region
        $region41: #{tpu_custom_call.1} parent=27 // pred_check
          %p403 = pneg %p132
        $region42: #{tpu_custom_call.1} parent=27 // pred_check_branch
          %405 = sbr.rel (%p403) target = $region44
        $region43: #{tpu_custom_call.1} parent=27 // pred_region
          _
        $region44: #{tpu_custom_call.1} parent=27 // pred_fallthru
          _
        // Predicated region
        $region45: #{tpu_custom_call.1} parent=27 // pred_check
          %p406 = pneg %p160
        $region46: #{tpu_custom_call.1} parent=27 // pred_check_branch
          %408 = sbr.rel (%p406) target = $region48
        $region47: #{tpu_custom_call.1} parent=27 // pred_region
          _
        $region48: #{tpu_custom_call.1} parent=27 // pred_fallthru
          _
      $region28: #{tpu_custom_call.1} parent=5 // pred_fallthru
        _
      %p409 = scmp.le.s32.totalorder 2, %s18
      // Predicated region
      $region49: #{tpu_custom_call.1} parent=5 // pred_check
        %p410 = pneg %p409
      $region50: #{tpu_custom_call.1} parent=5 // pred_check_branch
        %412 = sbr.rel (%p410) target = $region52
      $region51: #{tpu_custom_call.1} parent=5 // pred_region
        %s413 = ssub.s32 %s18, 2
        // Predicated region
        $region53: #{tpu_custom_call.1} parent=51 // pred_check
          %p414 = pneg %p110
        $region54: #{tpu_custom_call.1} parent=51 // pred_check_branch
          %416 = sbr.rel (%p414) target = $region56
        $region55: #{tpu_custom_call.1} parent=51 // pred_region
          %s417 = sand.u32 %s95, 1
          %s418 = scalar_lea.sflag [#allocation4], %s417
          %s419 = sand.u32 %s95, 1
          %s420 = smul.addr %s419, 4
          %s421 = scalar_lea.vmem [#allocation7], %s420
          %422 = dma.done %s418, 64
        $region56: #{tpu_custom_call.1} parent=51 // pred_fallthru
          _
        // Predicated region
        $region57: #{tpu_custom_call.1} parent=51 // pred_check
          %p423 = pneg %p138
        $region58: #{tpu_custom_call.1} parent=51 // pred_check_branch
          %425 = sbr.rel (%p423) target = $region60
        $region59: #{tpu_custom_call.1} parent=51 // pred_region
          %p426 = scmp.lt.s32.totalorder %s29, 1
          %s427 = scalar_select %p426, %s29, 1
          %p428 = scmp.lt.s32.totalorder %s30, 1
          %s429 = scalar_select %p428, %s30, 1
          %s430 = smul.addr %s427, 2
          %s431 = sadd.s32 %s429, %s430
          %s432 = smul.addr %s431, 8
          %s433 = scalar_lea.vmem %s3, %s432
        $region60: #{tpu_custom_call.1} parent=51 // pred_fallthru
          _
        // Predicated region
        $region61: #{tpu_custom_call.1} parent=51 // pred_check
          %p434 = pneg %p166
        $region62: #{tpu_custom_call.1} parent=51 // pred_check_branch
          %436 = sbr.rel (%p434) target = $region64
        $region63: #{tpu_custom_call.1} parent=51 // pred_region
          %p437 = scmp.lt.s32.totalorder %s29, 1
          %s438 = scalar_select %p437, %s29, 1
          %p439 = scmp.lt.s32.totalorder %s30, 1
          %s440 = scalar_select %p439, %s30, 1
          %s441 = smul.addr %s438, 2
          %s442 = sadd.s32 %s440, %s441
          %s443 = smul.addr %s442, 8
          %s444 = scalar_lea.vmem %s4, %s443
        $region64: #{tpu_custom_call.1} parent=51 // pred_fallthru
          _
      $region52: #{tpu_custom_call.1} parent=5 // pred_fallthru
        _
    $region6: #{tpu_custom_call.1} parent=1 // loop_footer
      %s22 = sadd.s32 1, %s18
    $region7: #{tpu_custom_call.1} parent=1 // loop_footer_branch
      %17 = sbr.rel target = $region3
    $region8: #{tpu_custom_call.1} parent=1 // loop_exit
      _
    %445 = vsyncpa [#allocation3], 1
    %s446 = scalar_lea.sflag [#allocation3], 1
    %447 = vsyncpa %s446, 1
    %448 = vsyncpa [#allocation6], 1
    %449 = vsyncpa [#allocation4], 1
    %s450 = scalar_lea.sflag [#allocation4], 1
    %451 = vsyncpa %s450, 1

</llo_original>
